<compile_context>
chip_gen: v5e
topology: v5e:2x2
jax: 0.10.0
libtpu: 0.0.40
codegen_flags: <defaults>
</compile_context>

<pallas_src>
import jax
import jax.numpy as jnp
from jax.experimental import pallas as pl
from jax.experimental.pallas import tpu as pltpu


def _round_up(a, b):
    return -(-a // b) * b


def _upconv_kernel(w_ref, x_ref, o_ref):
    # w_ref: (Cout*8, Cin)  folded weight, f32, resident across the grid
    # x_ref: (Cin, tm)      voxel columns (f32), lane-dense
    # o_ref: (Cout*8, tm)   lane-dense bf16 store, f32 accumulation in the dot
    y = jnp.dot(w_ref[...], x_ref[...], preferred_element_type=jnp.float32)
    o_ref[...] = y.astype(o_ref.dtype)


def _derive_tile(c_in, c_out8, dhw):
    """Pick the m-tile size from the actual VMEM budget (v7x has 64 MiB/TC)."""
    try:
        vmem_cap = int(pltpu.get_tpu_info().vmem_capacity_bytes)
    except Exception:
        vmem_cap = 64 << 20                    # conservative: v7x per-TC VMEM
    budget = (3 * vmem_cap) // 4               # ~96 MiB on 128 MiB parts, ~48 MiB on v7x

    # double-buffered f32 input tile + double-buffered bf16 output tile
    per_col = 2 * (c_in * 4 + c_out8 * 2)
    fixed = 2 * c_out8 * c_in * 4              # folded weight (worst case: 2 buffers)
    tm_budget = max(128, ((budget - fixed) // per_col) // 128 * 128)

    # Target ~8 m-steps (>=2 pipelined steps per v7x TensorCore) without
    # shrinking tiles below DMA-efficient sizes when dhw is large.  For
    # dhw < 4*128 a multi-step m-grid is not possible; we just take 1-3 steps.
    tm_steps = _round_up(pl.cdiv(dhw, 8), 128)
    if dhw >= 4 * 512:
        tm_steps = max(tm_steps, 512)
    elif dhw >= 4 * 256:
        tm_steps = max(tm_steps, 256)
    tm = max(128, min(tm_budget, tm_steps, _round_up(dhw, 128)))
    return tm, budget


def unet_up_conv(x, w1, w2, *, out_dtype=jnp.float32, packed_output=False):
    """x : (N, Cin, D, H, W)  NCDHW (PyTorch convention), float32.

    w1 : Conv3d weight,          shape (Cmid, Cin, 1, 1, 1)   (Cmid == Cin here)
    w2 : ConvTranspose3d weight, shape (Cmid, Cout, 2, 2, 2)
    returns (default): (N, Cout, 2D, 2H, 2W) in `out_dtype`
    returns (packed_output=True): bf16 slab (N, Cout, 2, 2, 2, D, H, W) where
        [..., kd, kh, kw, d, h, w] == NCDHW[..., 2d+kd, 2h+kh, 2w+kw]; use it to
        skip the scatter-transpose HBM pass when the consumer can index blocks.
    """
    N, Cin, D, H, W = x.shape
    Cmid = w1.shape[0]
    Cout = w2.shape[1]
    Cout8 = Cout * 8
    dhw = D * H * W

    # ---- fold the two linear ops into one f32 weight: (Cout*8, Cin) ----------
    w1_mat = w1.reshape(Cmid, Cin).astype(jnp.float32)
    w2_mat = w2.reshape(Cmid, Cout8).astype(jnp.float32)
    w_fold = w2_mat.T @ w1_mat                  # rows ordered (o, kd, kh, kw)

    # ---- input: free reshape only (no transpose / cast / pad pre-passes) -----
    x3 = x.reshape(N, Cin, dhw)

    tm, vmem_limit = _derive_tile(Cin, Cout8, dhw)
    num_m = pl.cdiv(dhw, tm)                    # ragged last tile is masked by Pallas

    cost = pl.CostEstimate(
        flops=2 * N * dhw * Cin * Cout8,
        transcendentals=0,
        bytes_accessed=N * dhw * Cin * 4 + N * dhw * Cout8 * 2 + Cout8 * Cin * 4,
    )

    def run(single_buffer_weight):
        if single_buffer_weight:
            # Constant index_map => DMA'd once; Buffered(1) reclaims the second
            # weight buffer's VMEM for a larger tm on 64 MiB parts.
            w_spec = pl.BlockSpec((Cout8, Cin), lambda n, i: (0, 0),
                                  pipeline_mode=pl.Buffered(1))
        else:
            w_spec = pl.BlockSpec((Cout8, Cin), lambda n, i: (0, 0))
        return pl.pallas_call(
            _upconv_kernel,
            out_shape=jax.ShapeDtypeStruct((N, Cout8, dhw), jnp.bfloat16),
            grid_spec=pltpu.PrefetchScalarGridSpec(
                num_scalar_prefetch=0,
                grid=(N, num_m),
                in_specs=[
                    w_spec,
                    pl.BlockSpec((pl.Squeezed(), Cin, tm), lambda n, i: (n, 0, i)),
                ],
                out_specs=pl.BlockSpec((pl.Squeezed(), Cout8, tm),
                                       lambda n, i: (n, 0, i)),
            ),
            compiler_params=pltpu.CompilerParams(
                dimension_semantics=("parallel", "parallel"),
                vmem_limit_bytes=int(vmem_limit),
            ),
            cost_estimate=cost,
        )(w_fold, x3)

    try:
        out = run(single_buffer_weight=True)
    except Exception:
        # pipeline_mode / pl.Buffered not supported on this jax build.
        out = run(single_buffer_weight=False)

    y = out.reshape(N, Cout, 2, 2, 2, D, H, W)   # (n, o, kd, kh, kw, d, h, w)
    if packed_output:
        return y                                  # zero extra HBM passes

    # Scatter each voxel's 2x2x2 block into the NCDHW upsampled layout: one
    # bf16-read / f32-write pass (the astype fuses with the transpose), vs the
    # old version's f32 kernel store + f32 transpose.
    y = jnp.transpose(y, (0, 1, 5, 2, 6, 3, 7, 4))   # n, o, d,kd, h,kh, w,kw
    return y.reshape(N, Cout, 2 * D, 2 * H, 2 * W).astype(out_dtype)


def _reference(x, w1, w2):
    """Pure-JAX f32 reference (same math, no Pallas) for correctness checks."""
    N, Cin, D, H, W = x.shape
    Cmid, Cout = w1.shape[0], w2.shape[1]
    z = jnp.einsum('ncdhw,mc->nmdhw', x, w1.reshape(Cmid, Cin))
    y = jnp.einsum('nmdhw,moijk->nodihjwk', z, w2)   # o=Cout, ijk=kd,kh,kw
    return y.reshape(N, Cout, 2 * D, 2 * H, 2 * W)


if __name__ == "__main__":
    key = jax.random.PRNGKey(0)
    k_x, k_w1, k_w2 = jax.random.split(key, 3)

    N, Cin, Cout = 2, 8, 4
    D, H, W = 4, 8, 16            # DHW = 512 -> 4 m-tiles of 128 per batch elt

    x = jax.random.normal(k_x, (N, Cin, D, H, W), dtype=jnp.float32)
    w1 = jax.random.normal(k_w1, (Cin, Cin, 1, 1, 1), dtype=jnp.float32) * 0.1
    w2 = jax.random.normal(k_w2, (Cin, Cout, 2, 2, 2), dtype=jnp.float32) * 0.1

    out = unet_up_conv(x, w1, w2)
    out = jax.block_until_ready(out)

    ref = _reference(x, w1, w2)
    assert out.shape == (N, Cout, 2 * D, 2 * H, 2 * W)
    assert out.dtype == jnp.float32
    # bf16 kernel store with f32 accumulation -> loosened tolerance vs f32 ref
    assert jnp.allclose(out, ref, atol=2e-2, rtol=2e-2)

    packed = jax.block_until_ready(unet_up_conv(x, w1, w2, packed_output=True))
    assert packed.shape == (N, Cout, 2, 2, 2, D, H, W)

    print("KERNEL_OK")
</pallas_src>

<mosaic_0001>
module attributes {stable_mosaic.version = 11 : i64} {
  func.func @_upconv_kernel(%arg0: i32, %arg1: i32, %arg2: memref<32x8xf32, #tpu.memory_space<vmem>>, %arg3: memref<1x8x128xf32, #tpu.memory_space<vmem>>, %arg4: memref<1x32x128xbf16, #tpu.memory_space<vmem>>) attributes {dimension_semantics = [#tpu.dimension_semantics<parallel>, #tpu.dimension_semantics<parallel>], iteration_bounds = array<i64: 2, 4>, scalar_prefetch = 0 : i64, scratch_operands = 0 : i64, tpu.core_type = #tpu.core_type<tc>, window_params = [{pipeline_mode = #tpu.pipeline_mode<synchronous>, transform_indices = @transform_0, window_bounds = array<i64: 32, 8>}, {transform_indices = @transform_1, window_bounds = array<i64: 1, 8, 128>}, {transform_indices = @transform_2, window_bounds = array<i64: 1, 32, 128>}]} {
    %c0 = arith.constant 0 : index
    %c0_0 = arith.constant 0 : index
    %0 = vector.load %arg2[%c0, %c0_0] : memref<32x8xf32, #tpu.memory_space<vmem>>, vector<32x8xf32>
    %c0_1 = arith.constant 0 : index
    %c0_2 = arith.constant 0 : index
    %c0_3 = arith.constant 0 : index
    %1 = vector.load %arg3[%c0_1, %c0_2, %c0_3] : memref<1x8x128xf32, #tpu.memory_space<vmem>>, vector<1x8x128xf32>
    %2 = vector.shape_cast %1 : vector<1x8x128xf32> to vector<8x128xf32>
    %cst = arith.constant dense<0.000000e+00> : vector<32x128xf32>
    %3 = tpu.matmul %0, %2, %cst {dimension_numbers = #tpu.dot_dimension_numbers<[1], [0], [0], [1], [0, 0, 1, 1], [], []>} : vector<32x8xf32>, vector<8x128xf32>, vector<32x128xf32> -> vector<32x128xf32>
    %4 = arith.truncf %3 : vector<32x128xf32> to vector<32x128xbf16>
    %c0_4 = arith.constant 0 : index
    %c0_5 = arith.constant 0 : index
    %c0_6 = arith.constant 0 : index
    %5 = vector.load %arg4[%c0_4, %c0_5, %c0_6] : memref<1x32x128xbf16, #tpu.memory_space<vmem>>, vector<1x32x128xbf16>
    %6 = vector.shape_cast %5 : vector<1x32x128xbf16> to vector<32x128xbf16>
    %7 = vector.shape_cast %4 : vector<32x128xbf16> to vector<1x32x128xbf16>
    tpu.vector_store %arg4[%c0_4, %c0_5, %c0_6], %7 {strides = array<i32>} : memref<1x32x128xbf16, #tpu.memory_space<vmem>>, vector<1x32x128xbf16>,
    return
  }
  func.func @transform_0(%arg0: i32, %arg1: i32) -> (i32, i32) {
    %c0_i32 = arith.constant 0 : i32
    %c0_i32_0 = arith.constant 0 : i32
    %c0_i32_1 = arith.constant 0 : i32
    return %c0_i32, %c0_i32_0 : i32, i32
  }
  func.func @transform_1(%arg0: i32, %arg1: i32) -> (i32, i32, i32) {
    %c0_i32 = arith.constant 0 : i32
    %c0_i32_0 = arith.constant 0 : i32
    return %arg0, %c0_i32, %arg1 : i32, i32, i32
  }
  func.func @transform_2(%arg0: i32, %arg1: i32) -> (i32, i32, i32) {
    %c0_i32 = arith.constant 0 : i32
    %c0_i32_0 = arith.constant 0 : i32
    return %arg0, %c0_i32, %arg1 : i32, i32, i32
  }
}

module attributes {stable_mosaic.version = 11 : i64} {
  func.func @_upconv_kernel(%arg0: i32, %arg1: i32, %arg2: memref<32x8xf32, #tpu.memory_space<vmem>>, %arg3: memref<1x8x128xf32, #tpu.memory_space<vmem>>, %arg4: memref<1x32x128xbf16, #tpu.memory_space<vmem>>) attributes {dimension_semantics = [#tpu.dimension_semantics<parallel>, #tpu.dimension_semantics<parallel>], iteration_bounds = array<i64: 2, 4>, scalar_prefetch = 0 : i64, scratch_operands = 0 : i64, tpu.core_type = #tpu.core_type<tc>, window_params = [{pipeline_mode = #tpu.pipeline_mode<synchronous>, transform_indices = @transform_0, window_bounds = array<i64: 32, 8>}, {transform_indices = @transform_1, window_bounds = array<i64: 1, 8, 128>}, {transform_indices = @transform_2, window_bounds = array<i64: 1, 32, 128>}]} {
    %c0 = arith.constant 0 : index
    %c0_0 = arith.constant 0 : index
    %0 = vector.load %arg2[%c0, %c0_0] : memref<32x8xf32, #tpu.memory_space<vmem>>, vector<32x8xf32>
    %c0_1 = arith.constant 0 : index
    %c0_2 = arith.constant 0 : index
    %c0_3 = arith.constant 0 : index
    %1 = vector.load %arg3[%c0_1, %c0_2, %c0_3] : memref<1x8x128xf32, #tpu.memory_space<vmem>>, vector<1x8x128xf32>
    %2 = vector.shape_cast %1 : vector<1x8x128xf32> to vector<8x128xf32>
    %cst = arith.constant dense<0.000000e+00> : vector<32x128xf32>
    %3 = tpu.matmul %0, %2, %cst {dimension_numbers = #tpu.dot_dimension_numbers<[1], [0], [0], [1], [0, 0, 1, 1], [], []>} : vector<32x8xf32>, vector<8x128xf32>, vector<32x128xf32> -> vector<32x128xf32>
    %4 = arith.truncf %3 : vector<32x128xf32> to vector<32x128xbf16>
    %c0_4 = arith.constant 0 : index
    %c0_5 = arith.constant 0 : index
    %c0_6 = arith.constant 0 : index
    %5 = vector.load %arg4[%c0_4, %c0_5, %c0_6] : memref<1x32x128xbf16, #tpu.memory_space<vmem>>, vector<1x32x128xbf16>
    %6 = vector.shape_cast %5 : vector<1x32x128xbf16> to vector<32x128xbf16>
    %7 = vector.shape_cast %4 : vector<32x128xbf16> to vector<1x32x128xbf16>
    tpu.vector_store %arg4[%c0_4, %c0_5, %c0_6], %7 {strides = array<i32>} : memref<1x32x128xbf16, #tpu.memory_space<vmem>>, vector<1x32x128xbf16>,
    return
  }
  func.func @transform_0(%arg0: i32, %arg1: i32) -> (i32, i32) {
    %c0_i32 = arith.constant 0 : i32
    %c0_i32_0 = arith.constant 0 : i32
    %c0_i32_1 = arith.constant 0 : i32
    return %c0_i32, %c0_i32_0 : i32, i32
  }
  func.func @transform_1(%arg0: i32, %arg1: i32) -> (i32, i32, i32) {
    %c0_i32 = arith.constant 0 : i32
    %c0_i32_0 = arith.constant 0 : i32
    return %arg0, %c0_i32, %arg1 : i32, i32, i32
  }
  func.func @transform_2(%arg0: i32, %arg1: i32) -> (i32, i32, i32) {
    %c0_i32 = arith.constant 0 : i32
    %c0_i32_0 = arith.constant 0 : i32
    return %arg0, %c0_i32, %arg1 : i32, i32, i32
  }
}

</mosaic_0001>

<llo_original>
// kernel: tpu_custom_call.1
$region0: #{tpu_custom_call.1}
  #allocation0 [shape = 'u32[]', space=smem, size = 0x4, offset = 0x4, fixed_abs, tag = 'smem constant byte address 0x4 - core index']
  #allocation1 [shape = 'u32[72,128]{1,0:T(1,128)}', space=vmem, size = 0x9000, scoped, tag = 'internal scratch']
  %s0 = inlined_call_operand.vmem [shape: f32[32,8], index: 0, kind: input, shape index: {}]
  %s1 = inlined_call_operand.hbm [shape: f32[2,8,512], index: 1, kind: input, shape index: {}]
  %s2 = inlined_call_operand.hbm [shape: bf16[2,32,512], index: 2, kind: output, shape index: {}]
  %s3 = sld [smem:[#allocation0]]
  $region45: #{tpu_custom_call.1} parent=0
    _
  %s5 = ssub.s32 1, %s3
  %s6 = scalar_select 0, %s5, %s3
  $region1: #{tpu_custom_call.1} parent=0
    #allocation2 [shape = 'u8[8192]{0}', space=vmem, size = 0x2000, scoped, tag = 'input window, operand 1']
    #allocation3 [shape = 's32[2]{0}', space=sflag, size = 0x8, scoped, tag = 'scoped memory for tpu_custom_call.1']
    #allocation4 [shape = 's32[2]{0}', space=sflag, size = 0x8, scoped, tag = 'scoped memory for tpu_custom_call.1']
    #allocation5 [shape = 'u8[16384]{0}', space=vmem, size = 0x4000, scoped, tag = 'output window, operand 0']
    %7 = vsyncpa [#allocation3], 0
    %s8 = scalar_lea.sflag [#allocation3], 1
    %9 = vsyncpa %s8, 0
    %10 = vsyncpa [#allocation4], 0
    %s11 = scalar_lea.sflag [#allocation4], 1
    %12 = vsyncpa %s11, 0
    loop: start=0, step=1, limit=10
    $region2: #{tpu_custom_call.1} parent=1 // loop_pre_header
      _
    $region3: #{tpu_custom_call.1} parent=1 // loop_header
      %s14 = sphi 0, %s18
      %p15 = scmp.ge.s32.totalorder %s14, 10
      %s21 = sphi 0, %s33
      %s22 = sphi 0, %s29
      %s23 = sphi 0, %s21
      %s24 = sphi 0, %s22
      %s25 = sphi 0, %s23
      %s26 = sphi 0, %s24
      %s34 = sphi 0, %s34
      %s36 = sphi 0, %s34
      %s37 = sphi 0, %s36
      %s51 = sphi 0, %s37
      %s59 = sphi 0, %s61
      %s62 = sphi 0, %s59
      %s63 = sphi 0, %s62
      %s79 = sphi 0, %s63
      %s87 = sphi 0, %s89
      %s90 = sphi 0, %s87
      %s91 = sphi 0, %s90
      %s107 = sphi 0, %s91
    $region4: #{tpu_custom_call.1} parent=1 // loop_header_branch
      %17 = sbr.rel (%p15) target = $region8
    $region5: #{tpu_custom_call.1} parent=1 // loop_body
      %s19 = ssub.s32 %s14, 1
      %s20 = ssub.s32 %s14, 2
      %s27 = sadd.s32 1, %s22
      %p28 = scmp.ge.s32.totalorder %s27, 4
      %s29 = scalar_select %p28, 0, %s27
      %s30 = sadd.s32 1, %s21
      %s31 = scalar_select %p28, %s30, %s21
      %p32 = scmp.ge.s32.totalorder %s31, 2
      %s33 = scalar_select %p32, 0, %s31
      %s35 = sadd.s32 %s34, 1
      %p38 = scmp.eq.s32.totalorder %s14, 7
      %p39 = scmp.ne.s32.totalorder %s34, %s36
      %p40 = scmp.eq.s32.totalorder %s14, 0
      %p41 = por %p39, %p40
      %p42 = scmp.ne.s32.totalorder %s34, %s36
      %p43 = scmp.eq.s32.totalorder %s19, 7
      %p44 = por %p42, %p43
      %p45 = scmp.ne.s32.totalorder %s36, %s37
      %p46 = scmp.eq.s32.totalorder %s19, 0
      %p47 = por %p45, %p46
      %p48 = scmp.ne.s32.totalorder %s36, %s37
      %p49 = scmp.eq.s32.totalorder %s20, 7
      %p50 = por %p48, %p49
      %p52 = scmp.ne.s32.totalorder %s37, %s51
      %p53 = scmp.eq.s32.totalorder %s20, 0
      %p54 = por %p52, %p53
      %s55 = ssub.s32 %s21, %s33
      %s56 = ssub.s32 %s22, %s29
      %s57 = sor.u32 %s55, %s56
      %p58 = scmp.eq.s32.totalorder %s57, 0
      %s60 = sadd.s32 %s59, 1
      %s61 = scalar_select %p58, %s59, %s60
      %p64 = pneg %p58
      %p65 = scmp.eq.s32.totalorder %s14, 7
      %p66 = por %p64, %p65
      %p67 = scmp.ne.s32.totalorder %s59, %s62
      %p68 = scmp.eq.s32.totalorder %s14, 0
      %p69 = por %p67, %p68
      %p70 = scmp.ne.s32.totalorder %s59, %s62
      %p71 = scmp.eq.s32.totalorder %s19, 7
      %p72 = por %p70, %p71
      %p73 = scmp.ne.s32.totalorder %s62, %s63
      %p74 = scmp.eq.s32.totalorder %s19, 0
      %p75 = por %p73, %p74
      %p76 = scmp.ne.s32.totalorder %s62, %s63
      %p77 = scmp.eq.s32.totalorder %s20, 7
      %p78 = por %p76, %p77
      %p80 = scmp.ne.s32.totalorder %s63, %s79
      %p81 = scmp.eq.s32.totalorder %s20, 0
      %p82 = por %p80, %p81
      %s83 = ssub.s32 %s21, %s33
      %s84 = ssub.s32 %s22, %s29
      %s85 = sor.u32 %s83, %s84
      %p86 = scmp.eq.s32.totalorder %s85, 0
      %s88 = sadd.s32 %s87, 1
      %s89 = scalar_select %p86, %s87, %s88
      %p92 = pneg %p86
      %p93 = scmp.eq.s32.totalorder %s14, 7
      %p94 = por %p92, %p93
      %p95 = scmp.ne.s32.totalorder %s87, %s90
      %p96 = scmp.eq.s32.totalorder %s14, 0
      %p97 = por %p95, %p96
      %p98 = scmp.ne.s32.totalorder %s87, %s90
      %p99 = scmp.eq.s32.totalorder %s19, 7
      %p100 = por %p98, %p99
      %p101 = scmp.ne.s32.totalorder %s90, %s91
      %p102 = scmp.eq.s32.totalorder %s19, 0
      %p103 = por %p101, %p102
      %p104 = scmp.ne.s32.totalorder %s90, %s91
      %p105 = scmp.eq.s32.totalorder %s20, 7
      %p106 = por %p104, %p105
      %p108 = scmp.ne.s32.totalorder %s91, %s107
      %p109 = scmp.eq.s32.totalorder %s20, 0
      %p110 = por %p108, %p109
      %p111 = scmp.le.s32.totalorder 1, %s14
      %p112 = scmp.lt.s32.totalorder %s14, 9
      %p113 = pnand %p111, %p112
      %p114 = pneg %p113
      // Predicated region
      $region9: #{tpu_custom_call.1} parent=5 // pred_check
        _
      $region10: #{tpu_custom_call.1} parent=5 // pred_check_branch
        %116 = sbr.rel (%p113) target = $region12
      $region11: #{tpu_custom_call.1} parent=5 // pred_region
        %s117 = ssub.s32 %s14, 1
        // Predicated region
        $region13: #{tpu_custom_call.1} parent=11 // pred_check
          %p118 = pneg %p47
        $region14: #{tpu_custom_call.1} parent=11 // pred_check_branch
          %120 = sbr.rel (%p118) target = $region16
        $region15: #{tpu_custom_call.1} parent=11 // pred_region
          _
        $region16: #{tpu_custom_call.1} parent=11 // pred_fallthru
          _
      $region12: #{tpu_custom_call.1} parent=5 // pred_fallthru
        _
      %p121 = scmp.lt.s32.totalorder %s14, 8
      // Predicated region
      $region17: #{tpu_custom_call.1} parent=5 // pred_check
        %p122 = pneg %p121
      $region18: #{tpu_custom_call.1} parent=5 // pred_check_branch
        %124 = sbr.rel (%p122) target = $region20
      $region19: #{tpu_custom_call.1} parent=5 // pred_region
        // Predicated region
        $region21: #{tpu_custom_call.1} parent=19 // pred_check
          %p125 = pneg %p69
        $region22: #{tpu_custom_call.1} parent=19 // pred_check_branch
          %127 = sbr.rel (%p125) target = $region24
        $region23: #{tpu_custom_call.1} parent=19 // pred_region
          %s128 = sand.u32 %s59, 1
          %s129 = scalar_lea.sflag [#allocation3], %s128
          %s130 = sand.u32 %s59, 1
          %s131 = smul.addr %s130, 8
          %s132 = scalar_lea.vmem [#allocation2], %s131
          %134 = vsyncadd %s129, 0
          %s135 = smul.addr %s21, 4
          %s136 = sadd.s32 %s22, %s135
          %s137 = smul.addr %s136, 8
          %s138 = scalar_lea.hbm %s1, %s137
          %s140 = sshll.u32 %s138, 4
          %s141 = int_to_ptr.hbm [resolvable:$true] %s140
          %s142 = sshll.u32 %s132, 4
          %s143 = int_to_ptr.vmem [resolvable:$true] %s142
          %145 = dma.hbm_to_vmem [thread:$0]  %s141, 128, %s143, %s129
        $region24: #{tpu_custom_call.1} parent=19 // pred_fallthru
          _
      $region20: #{tpu_custom_call.1} parent=5 // pred_fallthru
        _
      %p146 = scmp.le.s32.totalorder 1, %s14
      %p147 = scmp.lt.s32.totalorder %s14, 9
      %p148 = pnand %p146, %p147
      %p149 = pneg %p148
      // Predicated region
      $region25: #{tpu_custom_call.1} parent=5 // pred_check
        _
      $region26: #{tpu_custom_call.1} parent=5 // pred_check_branch
        %151 = sbr.rel (%p148) target = $region28
      $region27: #{tpu_custom_call.1} parent=5 // pred_region
        %s152 = ssub.s32 %s14, 1
        %s153 = sand.u32 %s62, 1
        %s154 = scalar_lea.sflag [#allocation3], %s153
        %s155 = sand.u32 %s62, 1
        %s156 = smul.addr %s155, 8
        %s157 = scalar_lea.vmem [#allocation2], %s156
        // Predicated region
        $region29: #{tpu_custom_call.1} parent=27 // pred_check
          %p158 = pneg %p75
        $region30: #{tpu_custom_call.1} parent=27 // pred_check_branch
          %160 = sbr.rel (%p158) target = $region32
        $region31: #{tpu_custom_call.1} parent=27 // pred_region
          %162 = dma.done %s154, 128
        $region32: #{tpu_custom_call.1} parent=27 // pred_fallthru
          _
        %p163 = pneg %p47
        %p164 = pneg %p44
        %s165 = sand.u32 %s62, 1
        %s166 = scalar_lea.sflag [#allocation3], %s165
        %s167 = sand.u32 %s62, 1
        %s168 = smul.addr %s167, 8
        %s169 = scalar_lea.vmem [#allocation2], %s168
        %p170 = pneg %p75
        %p171 = pneg %p72
        %p172 = pneg %p103
        %p173 = pneg %p100
        %s174 = sand.u32 %s90, 1
        %s175 = scalar_lea.sflag [#allocation4], %s174
        %s176 = sand.u32 %s90, 1
        %s177 = smul.addr %s176, 16
        %s178 = scalar_lea.vmem [#allocation5], %s177
        %v179 = vld [vmem:[%s0] sm:$0xff]
        %v180 = vld [vmem:[%s0 + $0x8] sm:$0xff]
        %v181 = vld [vmem:[%s0 + $0x10] sm:$0xff]
        %v182 = vld [vmem:[%s0 + $0x18] sm:$0xff]
        %v183 = vld [vmem:[%s157] sm:$0xff]
        %vm184 = vcmask 64512
        %v186 = vsel %vm184, %v179, 0
        %v189 = vsel %vm184, %v180, 0
        %v192 = vsel %vm184, %v181, 0
        %v195 = vsel %vm184, %v182, 0
        %197 = vmatpush.msra.mxu0 0.0
        %198 = vmatpush.msra.mxu0 0.0
        %199 = vmatpush.msra.mxu0 0.0
        %200 = vmatpush.msra.mxu0 0.0
        %201 = vmatpush.msra.mxu0 0.0
        %202 = vmatpush.msra.mxu0 0.0
        %203 = vmatpush.msra.mxu0 0.0
        %204 = vmatpush.msra.mxu0 0.0
        %205 = vmatpush.msra.mxu0 0.0
        %206 = vmatpush.msra.mxu0 0.0
        %207 = vmatpush.msra.mxu0 0.0
        %208 = vmatpush.msra.mxu0 0.0
        %209 = vmatpush.msra.mxu0 0.0
        %210 = vmatpush.msra.mxu0 0.0
        %211 = vmatpush.msra.mxu0 0.0
        %212 = vmatpush.msra.mxu0 %v183
        %213 = vmatmul.f32.gmra.mxu0 %v186
        %v214 = vpop.f32.mrf.mxu0
        %v215 = vadd.f32 0.0, %v214
        %216 = vmatmul.f32.gmra.mxu0 %v189
        %v217 = vpop.f32.mrf.mxu0
        %v218 = vadd.f32 0.0, %v217
        %219 = vmatmul.f32.gmra.mxu0 %v192
        %v220 = vpop.f32.mrf.mxu0
        %v221 = vadd.f32 0.0, %v220
        %222 = vmatmul.f32.gmra.mxu0 %v195
        %v223 = vpop.f32.mrf.mxu0
        %v224 = vadd.f32 0.0, %v223
        %225 = vdwg.mxu0
        %v226 = vpack.c.bf16 %v215, %v215
        %v227 = vpack.c.bf16 %v218, %v218
        %v228 = vpack.c.bf16 %v221, %v221
        %v229 = vpack.c.bf16 %v224, %v224
        %230 = vst [vmem:[%s178] sm:$0xf] %v226
        %231 = vst [vmem:[%s178 + $0x4] sm:$0xf] %v227
        %232 = vst [vmem:[%s178 + $0x8] sm:$0xf] %v228
        %233 = vst [vmem:[%s178 + $0xc] sm:$0xf] %v229
        %s234 = sand.u32 %s90, 1
        %s235 = scalar_lea.sflag [#allocation4], %s234
        %s236 = sand.u32 %s90, 1
        %s237 = smul.addr %s236, 16
        %s238 = scalar_lea.vmem [#allocation5], %s237
        // Predicated region
        $region33: #{tpu_custom_call.1} parent=27 // pred_check
          %p239 = pneg %p100
        $region34: #{tpu_custom_call.1} parent=27 // pred_check_branch
          %241 = sbr.rel (%p239) target = $region36
        $region35: #{tpu_custom_call.1} parent=27 // pred_region
          %243 = vsyncadd %s235, 0
          %s244 = smul.addr %s23, 16
          %s245 = sadd.s32 %s24, %s244
          %s246 = smul.addr %s245, 4
          %s247 = scalar_lea.hbm %s2, %s246
          %s248 = sshll.u32 %s238, 4
          %s249 = int_to_ptr.vmem [resolvable:$true] %s248
          %s250 = sshll.u32 %s247, 4
          %s251 = int_to_ptr.hbm [resolvable:$true] %s250
          %256 = dma.vmem_to_hbm [thread:$0]  %s249, 256, %s251, %s235, 64, 256, 4
        $region36: #{tpu_custom_call.1} parent=27 // pred_fallthru
          _
      $region28: #{tpu_custom_call.1} parent=5 // pred_fallthru
        _
      %p257 = scmp.le.s32.totalorder 2, %s14
      // Predicated region
      $region37: #{tpu_custom_call.1} parent=5 // pred_check
        %p258 = pneg %p257
      $region38: #{tpu_custom_call.1} parent=5 // pred_check_branch
        %260 = sbr.rel (%p258) target = $region40
      $region39: #{tpu_custom_call.1} parent=5 // pred_region
        %s261 = ssub.s32 %s14, 2
        // Predicated region
        $region41: #{tpu_custom_call.1} parent=39 // pred_check
          %p262 = pneg %p106
        $region42: #{tpu_custom_call.1} parent=39 // pred_check_branch
          %264 = sbr.rel (%p262) target = $region44
        $region43: #{tpu_custom_call.1} parent=39 // pred_region
          %s265 = sand.u32 %s91, 1
          %s266 = scalar_lea.sflag [#allocation4], %s265
          %s267 = sand.u32 %s91, 1
          %s268 = smul.addr %s267, 16
          %s269 = scalar_lea.vmem [#allocation5], %s268
          %271 = dma.done %s266, 256
        $region44: #{tpu_custom_call.1} parent=39 // pred_fallthru
          _
      $region40: #{tpu_custom_call.1} parent=5 // pred_fallthru
        _
    $region6: #{tpu_custom_call.1} parent=1 // loop_footer
      %s18 = sadd.s32 1, %s14
    $region7: #{tpu_custom_call.1} parent=1 // loop_footer_branch
      %13 = sbr.rel target = $region3
    $region8: #{tpu_custom_call.1} parent=1 // loop_exit
      _
    %272 = vsyncpa [#allocation3], 1
    %s273 = scalar_lea.sflag [#allocation3], 1
    %274 = vsyncpa %s273, 1
    %275 = vsyncpa [#allocation4], 1
    %s276 = scalar_lea.sflag [#allocation4], 1
    %277 = vsyncpa %s276, 1

// kernel: tpu_custom_call.1
$region0: #{tpu_custom_call.1}
  #allocation0 [shape = 'u32[]', space=smem, size = 0x4, offset = 0x4, fixed_abs, tag = 'smem constant byte address 0x4 - core index']
  #allocation1 [shape = 'u32[72,128]{1,0:T(1,128)}', space=vmem, size = 0x9000, scoped, tag = 'internal scratch']
  %s0 = inlined_call_operand.vmem [shape: f32[32,8], index: 0, kind: input, shape index: {}]
  %s1 = inlined_call_operand.hbm [shape: f32[2,8,512], index: 1, kind: input, shape index: {}]
  %s2 = inlined_call_operand.hbm [shape: bf16[2,32,512], index: 2, kind: output, shape index: {}]
  %s3 = sld [smem:[#allocation0]]
  $region45: #{tpu_custom_call.1} parent=0
    _
  %s5 = ssub.s32 1, %s3
  %s6 = scalar_select 0, %s5, %s3
  $region1: #{tpu_custom_call.1} parent=0
    #allocation2 [shape = 'u8[8192]{0}', space=vmem, size = 0x2000, scoped, tag = 'input window, operand 1']
    #allocation3 [shape = 's32[2]{0}', space=sflag, size = 0x8, scoped, tag = 'scoped memory for tpu_custom_call.1']
    #allocation4 [shape = 's32[2]{0}', space=sflag, size = 0x8, scoped, tag = 'scoped memory for tpu_custom_call.1']
    #allocation5 [shape = 'u8[16384]{0}', space=vmem, size = 0x4000, scoped, tag = 'output window, operand 0']
    %7 = vsyncpa [#allocation3], 0
    %s8 = scalar_lea.sflag [#allocation3], 1
    %9 = vsyncpa %s8, 0
    %10 = vsyncpa [#allocation4], 0
    %s11 = scalar_lea.sflag [#allocation4], 1
    %12 = vsyncpa %s11, 0
    loop: start=0, step=1, limit=10
    $region2: #{tpu_custom_call.1} parent=1 // loop_pre_header
      _
    $region3: #{tpu_custom_call.1} parent=1 // loop_header
      %s14 = sphi 0, %s18
      %p15 = scmp.ge.s32.totalorder %s14, 10
      %s21 = sphi 0, %s33
      %s22 = sphi 0, %s29
      %s23 = sphi 0, %s21
      %s24 = sphi 0, %s22
      %s25 = sphi 0, %s23
      %s26 = sphi 0, %s24
      %s34 = sphi 0, %s34
      %s36 = sphi 0, %s34
      %s37 = sphi 0, %s36
      %s51 = sphi 0, %s37
      %s59 = sphi 0, %s61
      %s62 = sphi 0, %s59
      %s63 = sphi 0, %s62
      %s79 = sphi 0, %s63
      %s87 = sphi 0, %s89
      %s90 = sphi 0, %s87
      %s91 = sphi 0, %s90
      %s107 = sphi 0, %s91
    $region4: #{tpu_custom_call.1} parent=1 // loop_header_branch
      %17 = sbr.rel (%p15) target = $region8
    $region5: #{tpu_custom_call.1} parent=1 // loop_body
      %s19 = ssub.s32 %s14, 1
      %s20 = ssub.s32 %s14, 2
      %s27 = sadd.s32 1, %s22
      %p28 = scmp.ge.s32.totalorder %s27, 4
      %s29 = scalar_select %p28, 0, %s27
      %s30 = sadd.s32 1, %s21
      %s31 = scalar_select %p28, %s30, %s21
      %p32 = scmp.ge.s32.totalorder %s31, 2
      %s33 = scalar_select %p32, 0, %s31
      %s35 = sadd.s32 %s34, 1
      %p38 = scmp.eq.s32.totalorder %s14, 7
      %p39 = scmp.ne.s32.totalorder %s34, %s36
      %p40 = scmp.eq.s32.totalorder %s14, 0
      %p41 = por %p39, %p40
      %p42 = scmp.ne.s32.totalorder %s34, %s36
      %p43 = scmp.eq.s32.totalorder %s19, 7
      %p44 = por %p42, %p43
      %p45 = scmp.ne.s32.totalorder %s36, %s37
      %p46 = scmp.eq.s32.totalorder %s19, 0
      %p47 = por %p45, %p46
      %p48 = scmp.ne.s32.totalorder %s36, %s37
      %p49 = scmp.eq.s32.totalorder %s20, 7
      %p50 = por %p48, %p49
      %p52 = scmp.ne.s32.totalorder %s37, %s51
      %p53 = scmp.eq.s32.totalorder %s20, 0
      %p54 = por %p52, %p53
      %s55 = ssub.s32 %s21, %s33
      %s56 = ssub.s32 %s22, %s29
      %s57 = sor.u32 %s55, %s56
      %p58 = scmp.eq.s32.totalorder %s57, 0
      %s60 = sadd.s32 %s59, 1
      %s61 = scalar_select %p58, %s59, %s60
      %p64 = pneg %p58
      %p65 = scmp.eq.s32.totalorder %s14, 7
      %p66 = por %p64, %p65
      %p67 = scmp.ne.s32.totalorder %s59, %s62
      %p68 = scmp.eq.s32.totalorder %s14, 0
      %p69 = por %p67, %p68
      %p70 = scmp.ne.s32.totalorder %s59, %s62
      %p71 = scmp.eq.s32.totalorder %s19, 7
      %p72 = por %p70, %p71
      %p73 = scmp.ne.s32.totalorder %s62, %s63
      %p74 = scmp.eq.s32.totalorder %s19, 0
      %p75 = por %p73, %p74
      %p76 = scmp.ne.s32.totalorder %s62, %s63
      %p77 = scmp.eq.s32.totalorder %s20, 7
      %p78 = por %p76, %p77
      %p80 = scmp.ne.s32.totalorder %s63, %s79
      %p81 = scmp.eq.s32.totalorder %s20, 0
      %p82 = por %p80, %p81
      %s83 = ssub.s32 %s21, %s33
      %s84 = ssub.s32 %s22, %s29
      %s85 = sor.u32 %s83, %s84
      %p86 = scmp.eq.s32.totalorder %s85, 0
      %s88 = sadd.s32 %s87, 1
      %s89 = scalar_select %p86, %s87, %s88
      %p92 = pneg %p86
      %p93 = scmp.eq.s32.totalorder %s14, 7
      %p94 = por %p92, %p93
      %p95 = scmp.ne.s32.totalorder %s87, %s90
      %p96 = scmp.eq.s32.totalorder %s14, 0
      %p97 = por %p95, %p96
      %p98 = scmp.ne.s32.totalorder %s87, %s90
      %p99 = scmp.eq.s32.totalorder %s19, 7
      %p100 = por %p98, %p99
      %p101 = scmp.ne.s32.totalorder %s90, %s91
      %p102 = scmp.eq.s32.totalorder %s19, 0
      %p103 = por %p101, %p102
      %p104 = scmp.ne.s32.totalorder %s90, %s91
      %p105 = scmp.eq.s32.totalorder %s20, 7
      %p106 = por %p104, %p105
      %p108 = scmp.ne.s32.totalorder %s91, %s107
      %p109 = scmp.eq.s32.totalorder %s20, 0
      %p110 = por %p108, %p109
      %p111 = scmp.le.s32.totalorder 1, %s14
      %p112 = scmp.lt.s32.totalorder %s14, 9
      %p113 = pnand %p111, %p112
      %p114 = pneg %p113
      // Predicated region
      $region9: #{tpu_custom_call.1} parent=5 // pred_check
        _
      $region10: #{tpu_custom_call.1} parent=5 // pred_check_branch
        %116 = sbr.rel (%p113) target = $region12
      $region11: #{tpu_custom_call.1} parent=5 // pred_region
        %s117 = ssub.s32 %s14, 1
        // Predicated region
        $region13: #{tpu_custom_call.1} parent=11 // pred_check
          %p118 = pneg %p47
        $region14: #{tpu_custom_call.1} parent=11 // pred_check_branch
          %120 = sbr.rel (%p118) target = $region16
        $region15: #{tpu_custom_call.1} parent=11 // pred_region
          _
        $region16: #{tpu_custom_call.1} parent=11 // pred_fallthru
          _
      $region12: #{tpu_custom_call.1} parent=5 // pred_fallthru
        _
      %p121 = scmp.lt.s32.totalorder %s14, 8
      // Predicated region
      $region17: #{tpu_custom_call.1} parent=5 // pred_check
        %p122 = pneg %p121
      $region18: #{tpu_custom_call.1} parent=5 // pred_check_branch
        %124 = sbr.rel (%p122) target = $region20
      $region19: #{tpu_custom_call.1} parent=5 // pred_region
        // Predicated region
        $region21: #{tpu_custom_call.1} parent=19 // pred_check
          %p125 = pneg %p69
        $region22: #{tpu_custom_call.1} parent=19 // pred_check_branch
          %127 = sbr.rel (%p125) target = $region24
        $region23: #{tpu_custom_call.1} parent=19 // pred_region
          %s128 = sand.u32 %s59, 1
          %s129 = scalar_lea.sflag [#allocation3], %s128
          %s130 = sand.u32 %s59, 1
          %s131 = smul.addr %s130, 8
          %s132 = scalar_lea.vmem [#allocation2], %s131
          %134 = vsyncadd %s129, 0
          %s135 = smul.addr %s21, 4
          %s136 = sadd.s32 %s22, %s135
          %s137 = smul.addr %s136, 8
          %s138 = scalar_lea.hbm %s1, %s137
          %s140 = sshll.u32 %s138, 4
          %s141 = int_to_ptr.hbm [resolvable:$true] %s140
          %s142 = sshll.u32 %s132, 4
          %s143 = int_to_ptr.vmem [resolvable:$true] %s142
          %145 = dma.hbm_to_vmem [thread:$0]  %s141, 128, %s143, %s129
        $region24: #{tpu_custom_call.1} parent=19 // pred_fallthru
          _
      $region20: #{tpu_custom_call.1} parent=5 // pred_fallthru
        _
      %p146 = scmp.le.s32.totalorder 1, %s14
      %p147 = scmp.lt.s32.totalorder %s14, 9
      %p148 = pnand %p146, %p147
      %p149 = pneg %p148
      // Predicated region
      $region25: #{tpu_custom_call.1} parent=5 // pred_check
        _
      $region26: #{tpu_custom_call.1} parent=5 // pred_check_branch
        %151 = sbr.rel (%p148) target = $region28
      $region27: #{tpu_custom_call.1} parent=5 // pred_region
        %s152 = ssub.s32 %s14, 1
        %s153 = sand.u32 %s62, 1
        %s154 = scalar_lea.sflag [#allocation3], %s153
        %s155 = sand.u32 %s62, 1
        %s156 = smul.addr %s155, 8
        %s157 = scalar_lea.vmem [#allocation2], %s156
        // Predicated region
        $region29: #{tpu_custom_call.1} parent=27 // pred_check
          %p158 = pneg %p75
        $region30: #{tpu_custom_call.1} parent=27 // pred_check_branch
          %160 = sbr.rel (%p158) target = $region32
        $region31: #{tpu_custom_call.1} parent=27 // pred_region
          %162 = dma.done %s154, 128
        $region32: #{tpu_custom_call.1} parent=27 // pred_fallthru
          _
        %p163 = pneg %p47
        %p164 = pneg %p44
        %s165 = sand.u32 %s62, 1
        %s166 = scalar_lea.sflag [#allocation3], %s165
        %s167 = sand.u32 %s62, 1
        %s168 = smul.addr %s167, 8
        %s169 = scalar_lea.vmem [#allocation2], %s168
        %p170 = pneg %p75
        %p171 = pneg %p72
        %p172 = pneg %p103
        %p173 = pneg %p100
        %s174 = sand.u32 %s90, 1
        %s175 = scalar_lea.sflag [#allocation4], %s174
        %s176 = sand.u32 %s90, 1
        %s177 = smul.addr %s176, 16
        %s178 = scalar_lea.vmem [#allocation5], %s177
        %v179 = vld [vmem:[%s0] sm:$0xff]
        %v180 = vld [vmem:[%s0 + $0x8] sm:$0xff]
        %v181 = vld [vmem:[%s0 + $0x10] sm:$0xff]
        %v182 = vld [vmem:[%s0 + $0x18] sm:$0xff]
        %v183 = vld [vmem:[%s157] sm:$0xff]
        %vm184 = vcmask 64512
        %v186 = vsel %vm184, %v179, 0
        %v189 = vsel %vm184, %v180, 0
        %v192 = vsel %vm184, %v181, 0
        %v195 = vsel %vm184, %v182, 0
        %197 = vmatpush.msra.mxu0 0.0
        %198 = vmatpush.msra.mxu0 0.0
        %199 = vmatpush.msra.mxu0 0.0
        %200 = vmatpush.msra.mxu0 0.0
        %201 = vmatpush.msra.mxu0 0.0
        %202 = vmatpush.msra.mxu0 0.0
        %203 = vmatpush.msra.mxu0 0.0
        %204 = vmatpush.msra.mxu0 0.0
        %205 = vmatpush.msra.mxu0 0.0
        %206 = vmatpush.msra.mxu0 0.0
        %207 = vmatpush.msra.mxu0 0.0
        %208 = vmatpush.msra.mxu0 0.0
        %209 = vmatpush.msra.mxu0 0.0
        %210 = vmatpush.msra.mxu0 0.0
        %211 = vmatpush.msra.mxu0 0.0
        %212 = vmatpush.msra.mxu0 %v183
        %213 = vmatmul.f32.gmra.mxu0 %v186
        %v214 = vpop.f32.mrf.mxu0
        %v215 = vadd.f32 0.0, %v214
        %216 = vmatmul.f32.gmra.mxu0 %v189
        %v217 = vpop.f32.mrf.mxu0
        %v218 = vadd.f32 0.0, %v217
        %219 = vmatmul.f32.gmra.mxu0 %v192
        %v220 = vpop.f32.mrf.mxu0
        %v221 = vadd.f32 0.0, %v220
        %222 = vmatmul.f32.gmra.mxu0 %v195
        %v223 = vpop.f32.mrf.mxu0
        %v224 = vadd.f32 0.0, %v223
        %225 = vdwg.mxu0
        %v226 = vpack.c.bf16 %v215, %v215
        %v227 = vpack.c.bf16 %v218, %v218
        %v228 = vpack.c.bf16 %v221, %v221
        %v229 = vpack.c.bf16 %v224, %v224
        %230 = vst [vmem:[%s178] sm:$0xf] %v226
        %231 = vst [vmem:[%s178 + $0x4] sm:$0xf] %v227
        %232 = vst [vmem:[%s178 + $0x8] sm:$0xf] %v228
        %233 = vst [vmem:[%s178 + $0xc] sm:$0xf] %v229
        %s234 = sand.u32 %s90, 1
        %s235 = scalar_lea.sflag [#allocation4], %s234
        %s236 = sand.u32 %s90, 1
        %s237 = smul.addr %s236, 16
        %s238 = scalar_lea.vmem [#allocation5], %s237
        // Predicated region
        $region33: #{tpu_custom_call.1} parent=27 // pred_check
          %p239 = pneg %p100
        $region34: #{tpu_custom_call.1} parent=27 // pred_check_branch
          %241 = sbr.rel (%p239) target = $region36
        $region35: #{tpu_custom_call.1} parent=27 // pred_region
          %243 = vsyncadd %s235, 0
          %s244 = smul.addr %s23, 16
          %s245 = sadd.s32 %s24, %s244
          %s246 = smul.addr %s245, 4
          %s247 = scalar_lea.hbm %s2, %s246
          %s248 = sshll.u32 %s238, 4
          %s249 = int_to_ptr.vmem [resolvable:$true] %s248
          %s250 = sshll.u32 %s247, 4
          %s251 = int_to_ptr.hbm [resolvable:$true] %s250
          %256 = dma.vmem_to_hbm [thread:$0]  %s249, 256, %s251, %s235, 64, 256, 4
        $region36: #{tpu_custom_call.1} parent=27 // pred_fallthru
          _
      $region28: #{tpu_custom_call.1} parent=5 // pred_fallthru
        _
      %p257 = scmp.le.s32.totalorder 2, %s14
      // Predicated region
      $region37: #{tpu_custom_call.1} parent=5 // pred_check
        %p258 = pneg %p257
      $region38: #{tpu_custom_call.1} parent=5 // pred_check_branch
        %260 = sbr.rel (%p258) target = $region40
      $region39: #{tpu_custom_call.1} parent=5 // pred_region
        %s261 = ssub.s32 %s14, 2
        // Predicated region
        $region41: #{tpu_custom_call.1} parent=39 // pred_check
          %p262 = pneg %p106
        $region42: #{tpu_custom_call.1} parent=39 // pred_check_branch
          %264 = sbr.rel (%p262) target = $region44
        $region43: #{tpu_custom_call.1} parent=39 // pred_region
          %s265 = sand.u32 %s91, 1
          %s266 = scalar_lea.sflag [#allocation4], %s265
          %s267 = sand.u32 %s91, 1
          %s268 = smul.addr %s267, 16
          %s269 = scalar_lea.vmem [#allocation5], %s268
          %271 = dma.done %s266, 256
        $region44: #{tpu_custom_call.1} parent=39 // pred_fallthru
          _
      $region40: #{tpu_custom_call.1} parent=5 // pred_fallthru
        _
    $region6: #{tpu_custom_call.1} parent=1 // loop_footer
      %s18 = sadd.s32 1, %s14
    $region7: #{tpu_custom_call.1} parent=1 // loop_footer_branch
      %13 = sbr.rel target = $region3
    $region8: #{tpu_custom_call.1} parent=1 // loop_exit
      _
    %272 = vsyncpa [#allocation3], 1
    %s273 = scalar_lea.sflag [#allocation3], 1
    %274 = vsyncpa %s273, 1
    %275 = vsyncpa [#allocation4], 1
    %s276 = scalar_lea.sflag [#allocation4], 1
    %277 = vsyncpa %s276, 1

</llo_original>
